<compile_context>
chip_gen: v7x
topology: tpu7x:2x2x1
jax: 0.10.0
libtpu: 0.0.40
codegen_flags: <defaults>
</compile_context>

<pallas_src>
import jax
import jax.numpy as jnp
from jax.experimental import pallas as pl
from jax.experimental.pallas import tpu as pltpu


def _round_up(x, m):
    return ((x + m - 1) // m) * m


def _vmem_budget_bytes():
    """~75% of this chip's physical VMEM (per TensorCore), conservative fallback."""
    cap = 64 * 1024 * 1024  # fallback: v7x physical VMEM per core
    try:
        info = pltpu.get_tpu_info()
        cap = int(getattr(info, "vmem_capacity_bytes", cap))
    except Exception:
        pass
    cap = max(32 * 1024 * 1024, min(cap, 128 * 1024 * 1024))
    return (cap // 4) * 3


def _pick_tiles(B, d_in, d_out, in_size, out_size, sub, budget):
    """Largest hardware-aligned tiles that fit the VMEM budget.

    Priority: tk == padded d_in (kill the K loop) > large tn > large tm.
    """
    Mp0 = _round_up(B, sub)
    Kp0 = _round_up(d_in, 128)
    Np0 = _round_up(d_out, 128)

    def fits(tm, tn, tk):
        return (2 * tm * tk * in_size        # x tiles, double-buffered
                + 2 * tk * tn * in_size      # W tiles, double-buffered
                + 2 * tm * tn * out_size     # out tiles, double-buffered
                + tm * tn * 4                # f32 accumulator (worst case)
                + 2 * tn * 4                 # bias tiles
                ) <= budget

    def cands(full, cap):
        out = [full] if full <= cap else []
        v = cap
        while v >= 128:
            if v < full:
                out.append(v)
            v //= 2
        return out or [128]

    tm_full = min(Mp0, 512)
    tm_c = [tm_full] + [t for t in (256, 128, 64, 32, sub) if t < tm_full]
    tk_c = cands(Kp0, 2048)
    tn_c = cands(Np0, 2048)

    for tk in tk_c:              # largest tk first: tk == Kp0 removes the K axis
        for tn in tn_c:          # then largest tn: fewest x re-streams
            for tm in tm_c:      # then largest tm: fewest W re-streams
                if fits(tm, tn, tk):
                    return tm, tn, tk
    return sub, 128, 128


# ------------------------------ kernels -------------------------------------


def _linear_kernel_single_k(x_ref, w_ref, b_ref, o_ref):
    # Whole reduction dim in one block: o = x @ w + b, f32 accumulation on MXU.
    acc = jnp.dot(x_ref[...], w_ref[...], preferred_element_type=jnp.float32)
    o_ref[...] = (acc + b_ref[...]).astype(o_ref.dtype)


def _linear_kernel_multi_k_f32out(x_ref, w_ref, b_ref, o_ref):
    # f32 output: accumulate straight into the resident output block
    # (no scratch, no epilogue copy). Bias seeds the accumulator at k == 0.
    @pl.when(pl.program_id(2) == 0)
    def _():
        o_ref[...] = jnp.zeros_like(o_ref) + b_ref[...]

    o_ref[...] += jnp.dot(x_ref[...], w_ref[...],
                          preferred_element_type=jnp.float32)


def _linear_kernel_multi_k_acc(x_ref, w_ref, b_ref, o_ref, acc_ref):
    # Non-f32 output: resident f32 accumulator, bias-add + cast once at the end.
    k = pl.program_id(2)

    @pl.when(k == 0)
    def _():
        acc_ref[...] = jnp.zeros_like(acc_ref)

    acc_ref[...] += jnp.dot(x_ref[...], w_ref[...],
                            preferred_element_type=jnp.float32)

    @pl.when(k == pl.num_programs(2) - 1)
    def _():
        o_ref[...] = (acc_ref[...] + b_ref[...]).astype(o_ref.dtype)


# ------------------------------ wrapper --------------------------------------


def one_layer_nn_forward(x, weight, bias, *, compute_dtype=jnp.bfloat16,
                         tm=None, tn=None, tk=None):
    """Pallas implementation of nn.Linear(d_in, d_out) forward.

    x:      (B, d_in)
    weight: (d_out, d_in)  PyTorch nn.Linear layout
    bias:   (d_out,)
    compute_dtype: bf16 by default (f32 MXU accumulation kept); pass
                   jnp.float32 (or None) for full-precision inputs.
    Returns (B, d_out) in x's original dtype.
    """
    B, d_in = x.shape
    d_out, d_in_w = weight.shape
    assert d_in_w == d_in, "weight must be (d_out, d_in)"
    out_dtype = x.dtype

    if compute_dtype is None:
        compute_dtype = x.dtype
    compute_dtype = jnp.dtype(compute_dtype)
    in_size = compute_dtype.itemsize
    out_size = jnp.dtype(out_dtype).itemsize
    sub = 16 if in_size < 4 else 8       # sublane packing for sub-32-bit dtypes

    budget = _vmem_budget_bytes()
    atm, atn, atk = _pick_tiles(B, d_in, d_out, in_size, out_size, sub, budget)
    tm = _round_up(tm, sub) if tm is not None else atm
    tn = _round_up(tn, 128) if tn is not None else atn
    tk = _round_up(tk, 128) if tk is not None else atk

    Mp = _round_up(B, tm)
    Kp = _round_up(d_in, tk)
    Np = _round_up(d_out, tn)
    gm, gn, gk = Mp // tm, Np // tn, Kp // tk

    # One-time layout change: (d_out, d_in) -> (d_in, d_out) so the kernel
    # contracts the standard MXU layout (no per-k-step W-tile transpose).
    # TODO(synk): in a real model, do this transpose/pad/cast once at
    # parameter-load time rather than per forward call.
    xc = x.astype(compute_dtype) if x.dtype != compute_dtype else x
    wt = weight.astype(compute_dtype).T
    if (Mp, Kp) != (B, d_in):
        xc = jnp.pad(xc, ((0, Mp - B), (0, Kp - d_in)))
    if (Kp, Np) != (d_in, d_out):
        wt = jnp.pad(wt, ((0, Kp - d_in), (0, Np - d_out)))
    b2 = bias.astype(jnp.float32)
    if Np != d_out:
        b2 = jnp.pad(b2, (0, Np - d_out))
    b2 = b2.reshape(1, Np)

    cost = pl.CostEstimate(
        flops=2 * Mp * Np * Kp,
        transcendentals=0,
        bytes_accessed=(gn * Mp * Kp * in_size      # x re-streamed per N tile
                        + gm * Kp * Np * in_size    # W re-streamed per M tile
                        + Mp * Np * out_size
                        + gm * Np * 4),
    )

    if gk == 1:
        grid = (gm, gn)
        in_specs = [
            pl.BlockSpec((tm, tk), lambda i, j: (i, 0)),   # x tile
            pl.BlockSpec((tk, tn), lambda i, j: (0, j)),   # W.T tile (d_in, d_out)
            pl.BlockSpec((1, tn), lambda i, j: (0, j)),    # bias tile
        ]
        out_spec = pl.BlockSpec((tm, tn), lambda i, j: (i, j))
        kernel = _linear_kernel_single_k
        scratch = []
        dims = ("parallel", "parallel")
    else:
        grid = (gm, gn, gk)
        in_specs = [
            pl.BlockSpec((tm, tk), lambda i, j, k: (i, k)),
            pl.BlockSpec((tk, tn), lambda i, j, k: (k, j)),
            pl.BlockSpec((1, tn), lambda i, j, k: (0, j)),
        ]
        out_spec = pl.BlockSpec((tm, tn), lambda i, j, k: (i, j))
        dims = ("parallel", "parallel", "arbitrary")
        if jnp.dtype(out_dtype) == jnp.dtype(jnp.float32):
            kernel = _linear_kernel_multi_k_f32out
            scratch = []
        else:
            kernel = _linear_kernel_multi_k_acc
            scratch = [pltpu.VMEM((tm, tn), jnp.float32)]

    out_padded = pl.pallas_call(
        kernel,
        out_shape=jax.ShapeDtypeStruct((Mp, Np), out_dtype),
        grid_spec=pltpu.PrefetchScalarGridSpec(
            num_scalar_prefetch=0,
            grid=grid,
            in_specs=in_specs,
            out_specs=out_spec,
            scratch_shapes=scratch,
        ),
        compiler_params=pltpu.CompilerParams(
            dimension_semantics=dims,
            vmem_limit_bytes=int(budget),
        ),
        cost_estimate=cost,
    )(xc, wt, b2)

    if (Mp, Np) != (B, d_out):
        out_padded = out_padded[:B, :d_out]
    return out_padded


if __name__ == "__main__":
    key = jax.random.PRNGKey(0)
    kx, kw, kb = jax.random.split(key, 3)

    # ---- Test 1: OneLayerNN-sized forward, default bf16 compute ------------
    B, d_in, d_out = 8, 32, 16
    bound = 1.0 / jnp.sqrt(jnp.float32(d_in))
    weight = jax.random.uniform(kw, (d_out, d_in), jnp.float32, -bound, bound)
    bias = jax.random.uniform(kb, (d_out,), jnp.float32, -bound, bound)
    x = jax.random.normal(kx, (B, d_in), jnp.float32)

    out = jax.block_until_ready(one_layer_nn_forward(x, weight, bias))
    # bf16 inputs with f32 accumulation: compare against the same input rounding.
    xb = x.astype(jnp.bfloat16).astype(jnp.float32)
    wb = weight.astype(jnp.bfloat16).astype(jnp.float32)
    ref = xb @ wb.T + bias
    assert out.shape == (B, d_out)
    assert out.dtype == x.dtype
    assert jnp.allclose(out, ref, atol=1e-4, rtol=1e-4)

    # ---- Test 2: forced multi-tile grid (M, N and K axes all > 1), f32 -----
    B2, d_in2, d_out2 = 40, 384, 384
    k2x, k2w, k2b = jax.random.split(jax.random.PRNGKey(1), 3)
    bound2 = 1.0 / jnp.sqrt(jnp.float32(d_in2))
    w2 = jax.random.uniform(k2w, (d_out2, d_in2), jnp.float32, -bound2, bound2)
    b2v = jax.random.uniform(k2b, (d_out2,), jnp.float32, -bound2, bound2)
    x2 = jax.random.normal(k2x, (B2, d_in2), jnp.float32)
    out2 = jax.block_until_ready(
        one_layer_nn_forward(x2, w2, b2v, compute_dtype=jnp.float32,
                             tm=16, tn=128, tk=128))
    ref2 = x2 @ w2.T + b2v
    assert out2.shape == (B2, d_out2)
    assert jnp.allclose(out2, ref2, atol=2e-2, rtol=2e-2)

    # TODO(synk): fit/predict/score_accuracy/plot_history/save are host-side
    # training-loop / I-O logic, not expressible as a single TPU kernel.

    print("KERNEL_OK")
</pallas_src>

<mosaic_0001>
module attributes {stable_mosaic.version = 11 : i64} {
  func.func @_linear_kernel_single_k(%arg0: i32, %arg1: i32, %arg2: memref<16x128xbf16, #tpu.memory_space<vmem>>, %arg3: memref<128x128xbf16, #tpu.memory_space<vmem>>, %arg4: memref<1x128xf32, #tpu.memory_space<vmem>>, %arg5: memref<16x128xf32, #tpu.memory_space<vmem>>) attributes {dimension_semantics = [#tpu.dimension_semantics<parallel>, #tpu.dimension_semantics<parallel>], iteration_bounds = array<i64: 1, 1>, scalar_prefetch = 0 : i64, scratch_operands = 0 : i64, tpu.core_type = #tpu.core_type<tc>, window_params = [{transform_indices = @transform_0, window_bounds = array<i64: 16, 128>}, {transform_indices = @transform_1, window_bounds = array<i64: 128, 128>}, {transform_indices = @transform_2, window_bounds = array<i64: 1, 128>}, {transform_indices = @transform_3, window_bounds = array<i64: 16, 128>}]} {
    %c0 = arith.constant 0 : index
    %c0_0 = arith.constant 0 : index
    %0 = vector.load %arg2[%c0, %c0_0] : memref<16x128xbf16, #tpu.memory_space<vmem>>, vector<16x128xbf16>
    %c0_1 = arith.constant 0 : index
    %c0_2 = arith.constant 0 : index
    %1 = vector.load %arg3[%c0_1, %c0_2] : memref<128x128xbf16, #tpu.memory_space<vmem>>, vector<128x128xbf16>
    %cst = arith.constant dense<0.000000e+00> : vector<16x128xf32>
    %2 = tpu.matmul %0, %1, %cst {dimension_numbers = #tpu.dot_dimension_numbers<[1], [0], [0], [1], [0, 0, 1, 1], [], []>} : vector<16x128xbf16>, vector<128x128xbf16>, vector<16x128xf32> -> vector<16x128xf32>
    %c0_3 = arith.constant 0 : index
    %c0_4 = arith.constant 0 : index
    %3 = vector.load %arg4[%c0_3, %c0_4] : memref<1x128xf32, #tpu.memory_space<vmem>>, vector<1x128xf32>
    %4 = vector.broadcast %3 : vector<1x128xf32> to vector<16x128xf32>
    %5 = arith.addf %2, %4 : vector<16x128xf32>
    %c0_5 = arith.constant 0 : index
    %c0_6 = arith.constant 0 : index
    %6 = vector.load %arg5[%c0_5, %c0_6] : memref<16x128xf32, #tpu.memory_space<vmem>>, vector<16x128xf32>
    tpu.vector_store %arg5[%c0_5, %c0_6], %5 {strides = array<i32>} : memref<16x128xf32, #tpu.memory_space<vmem>>, vector<16x128xf32>,
    return
  }
  func.func @transform_0(%arg0: i32, %arg1: i32) -> (i32, i32) {
    %c0_i32 = arith.constant 0 : i32
    %c0_i32_0 = arith.constant 0 : i32
    return %arg0, %c0_i32 : i32, i32
  }
  func.func @transform_1(%arg0: i32, %arg1: i32) -> (i32, i32) {
    %c0_i32 = arith.constant 0 : i32
    %c0_i32_0 = arith.constant 0 : i32
    return %c0_i32, %arg1 : i32, i32
  }
  func.func @transform_2(%arg0: i32, %arg1: i32) -> (i32, i32) {
    %c0_i32 = arith.constant 0 : i32
    %c0_i32_0 = arith.constant 0 : i32
    return %c0_i32, %arg1 : i32, i32
  }
  func.func @transform_3(%arg0: i32, %arg1: i32) -> (i32, i32) {
    %c0_i32 = arith.constant 0 : i32
    return %arg0, %arg1 : i32, i32
  }
}

</mosaic_0001>

<llo_original>
// kernel: tpu_custom_call.1
$region0: #{tpu_custom_call.1}
  #allocation0 [shape = 'u32[]', space=smem, size = 0x4, offset = 0x4, fixed_abs, tag = 'smem constant byte address 0x4 - core index']
  #allocation1 [shape = 'u32[144,128]{1,0:T(1,128)}', space=vmem, size = 0x12000, scoped, tag = 'internal scratch']
  %s0 = inlined_call_operand.hbm [shape: bf16[16,128], index: 0, kind: input, shape index: {}]
  %s1 = inlined_call_operand.hbm [shape: bf16[128,128], index: 1, kind: input, shape index: {}]
  %s2 = inlined_call_operand.vmem [shape: f32[1,128], index: 2, kind: input, shape index: {}]
  %s3 = inlined_call_operand.hbm [shape: f32[16,128], index: 3, kind: output, shape index: {}]
  %s4 = sld [smem:[#allocation0]]
  $region30: #{tpu_custom_call.1} parent=0
    _
  %s6 = ssub.s32 1, %s4
  %s7 = scalar_select 0, %s6, %s4
  $region1: #{tpu_custom_call.1} parent=0
    #allocation2 [shape = 'u8[4096]{0}', space=vmem, size = 0x1000, scoped, tag = 'input window, operand 0, single buffered']
    #allocation3 [shape = 's32[1]{0}', space=sflag, size = 0x4, scoped, tag = 'scoped memory for tpu_custom_call.1']
    #allocation4 [shape = 's32[1]{0}', space=sflag, size = 0x4, scoped, tag = 'scoped memory for tpu_custom_call.1']
    #allocation5 [shape = 'u8[32768]{0}', space=vmem, size = 0x8000, scoped, tag = 'input window, operand 1, single buffered']
    #allocation6 [shape = 's32[1]{0}', space=sflag, size = 0x4, scoped, tag = 'scoped memory for tpu_custom_call.1']
    #allocation7 [shape = 'u8[8192]{0}', space=vmem, size = 0x2000, scoped, tag = 'output window, operand 0, single buffered']
    %8 = vsyncpa [#allocation3], 0
    %9 = vsyncpa [#allocation6], 0
    %10 = vsyncpa [#allocation4], 0
    // Predicated region
    $region2: #{tpu_custom_call.1} parent=1 // pred_check
      _
    $region3: #{tpu_custom_call.1} parent=1 // pred_check_branch
      %12 = sbr.rel (0) target = $region5
    $region4: #{tpu_custom_call.1} parent=1 // pred_region
      %s14 = ssub.s32 128, 128
      %15 = vsyncadd [#allocation3], %s14
      %s16 = sshll.u32 [#allocation2], 4
      %s17 = int_to_ptr.vmem [resolvable:$true] %s16
      %22 = dma.hbm_to_vmem [thread:$0]  %s0, 128, %s17, [#allocation3], 64, 64, 4
    $region5: #{tpu_custom_call.1} parent=1 // pred_fallthru
      _
    // Predicated region
    $region6: #{tpu_custom_call.1} parent=1 // pred_check
      _
    $region7: #{tpu_custom_call.1} parent=1 // pred_check_branch
      %24 = sbr.rel (0) target = $region9
    $region8: #{tpu_custom_call.1} parent=1 // pred_region
      %s26 = ssub.s32 1024, 1024
      %27 = vsyncadd [#allocation6], %s26
      %s28 = sshll.u32 [#allocation5], 4
      %s29 = int_to_ptr.vmem [resolvable:$true] %s28
      %34 = dma.hbm_to_vmem [thread:$0]  %s1, 1024, %s29, [#allocation6], 64, 64, 4
    $region9: #{tpu_custom_call.1} parent=1 // pred_fallthru
      _
    // Predicated region
    $region10: #{tpu_custom_call.1} parent=1 // pred_check
      _
    $region11: #{tpu_custom_call.1} parent=1 // pred_check_branch
      %36 = sbr.rel (0) target = $region13
    $region12: #{tpu_custom_call.1} parent=1 // pred_region
      _
    $region13: #{tpu_custom_call.1} parent=1 // pred_fallthru
      _
    // Predicated region
    $region14: #{tpu_custom_call.1} parent=1 // pred_check
      _
    $region15: #{tpu_custom_call.1} parent=1 // pred_check_branch
      %38 = sbr.rel (0) target = $region17
    $region16: #{tpu_custom_call.1} parent=1 // pred_region
      %39 = dma.done [#allocation3], 128
    $region17: #{tpu_custom_call.1} parent=1 // pred_fallthru
      _
    // Predicated region
    $region18: #{tpu_custom_call.1} parent=1 // pred_check
      _
    $region19: #{tpu_custom_call.1} parent=1 // pred_check_branch
      %41 = sbr.rel (0) target = $region21
    $region20: #{tpu_custom_call.1} parent=1 // pred_region
      %42 = dma.done [#allocation6], 1024
    $region21: #{tpu_custom_call.1} parent=1 // pred_fallthru
      _
    %v44 = vld [vmem:[#allocation2] sm:$0xf]
    %v45 = vld [vmem:[#allocation2 + $0x4] sm:$0xf]
    %v46 = vld [vmem:[#allocation5] sm:$0xf]
    %v47 = vld [vmem:[#allocation5 + $0x4] sm:$0xf]
    %v48 = vld [vmem:[#allocation5 + $0x8] sm:$0xf]
    %v49 = vld [vmem:[#allocation5 + $0xc] sm:$0xf]
    %v50 = vld [vmem:[#allocation5 + $0x10] sm:$0xf]
    %v51 = vld [vmem:[#allocation5 + $0x14] sm:$0xf]
    %v52 = vld [vmem:[#allocation5 + $0x18] sm:$0xf]
    %v53 = vld [vmem:[#allocation5 + $0x1c] sm:$0xf]
    %v54 = vld [vmem:[#allocation5 + $0x20] sm:$0xf]
    %v55 = vld [vmem:[#allocation5 + $0x24] sm:$0xf]
    %v56 = vld [vmem:[#allocation5 + $0x28] sm:$0xf]
    %v57 = vld [vmem:[#allocation5 + $0x2c] sm:$0xf]
    %v58 = vld [vmem:[#allocation5 + $0x30] sm:$0xf]
    %v59 = vld [vmem:[#allocation5 + $0x34] sm:$0xf]
    %v60 = vld [vmem:[#allocation5 + $0x38] sm:$0xf]
    %v61 = vld [vmem:[#allocation5 + $0x3c] sm:$0xf]
    %v62 = vld [vmem:[%s2] sm:$0x1]
    %v64 = vlaneseq
    %v65 = vshrl.u32 %v64, 7
    %v66 = vsub.s32 0, %v65
    %v67 = vrot.slane %v62, %v66
    %v71 = vunpack.c.l.b16 %v44
    %v72 = vunpack.c.l.b16 %v45
    %v73 = vpack.c.b16 %v72, %v71
    %v91 = vunpack.c.l.b16 %v46
    %v92 = vunpack.c.l.b16 %v47
    %v93 = vunpack.c.l.b16 %v48
    %v94 = vunpack.c.l.b16 %v49
    %v95 = vunpack.c.l.b16 %v50
    %v96 = vunpack.c.l.b16 %v51
    %v97 = vunpack.c.l.b16 %v52
    %v98 = vunpack.c.l.b16 %v53
    %v99 = vunpack.c.l.b16 %v54
    %v100 = vunpack.c.l.b16 %v55
    %v101 = vunpack.c.l.b16 %v56
    %v102 = vunpack.c.l.b16 %v57
    %v103 = vunpack.c.l.b16 %v58
    %v104 = vunpack.c.l.b16 %v59
    %v105 = vunpack.c.l.b16 %v60
    %v106 = vunpack.c.l.b16 %v61
    %v107 = vpack.c.b16 %v92, %v91
    %v108 = vpack.c.b16 %v94, %v93
    %v109 = vpack.c.b16 %v96, %v95
    %v110 = vpack.c.b16 %v98, %v97
    %v111 = vpack.c.b16 %v100, %v99
    %v112 = vpack.c.b16 %v102, %v101
    %v113 = vpack.c.b16 %v104, %v103
    %v114 = vpack.c.b16 %v106, %v105
    %123 = vmatprep.subr.bf16.mxu0 0
    %124 = vmatpush1.bf16.msra.mxu0 %v107
    %125 = vmatprep.subr.bf16.mxu0 0
    %126 = vmatpush1.bf16.msra.mxu0 %v108
    %127 = vmatprep.subr.bf16.mxu0 0
    %128 = vmatpush1.bf16.msra.mxu0 %v109
    %129 = vmatprep.subr.bf16.mxu0 0
    %130 = vmatpush1.bf16.msra.mxu0 %v110
    %131 = vmatprep.subr.bf16.mxu0 0
    %132 = vmatpush1.bf16.msra.mxu0 %v111
    %133 = vmatprep.subr.bf16.mxu0 0
    %134 = vmatpush1.bf16.msra.mxu0 %v112
    %135 = vmatprep.subr.bf16.mxu0 0
    %136 = vmatpush1.bf16.msra.mxu0 %v113
    %137 = vmatprep.subr.bf16.mxu0 0
    %138 = vmatpush1.bf16.msra.mxu0 %v114
    %139 = vmatprep.subr.bf16.mxu0 0
    %140 = vmatpush1.bf16.msra.mxu0 0
    %141 = vmatprep.subr.bf16.mxu0 0
    %142 = vmatpush1.bf16.msra.mxu0 0
    %143 = vmatprep.subr.bf16.mxu0 0
    %144 = vmatpush1.bf16.msra.mxu0 0
    %145 = vmatprep.subr.bf16.mxu0 0
    %146 = vmatpush1.bf16.msra.mxu0 0
    %147 = vmatprep.subr.bf16.mxu0 0
    %148 = vmatpush1.bf16.msra.mxu0 0
    %149 = vmatprep.subr.bf16.mxu0 0
    %150 = vmatpush1.bf16.msra.mxu0 0
    %151 = vmatprep.subr.bf16.mxu0 0
    %152 = vmatpush1.bf16.msra.mxu0 0
    %153 = vmatprep.subr.bf16.mxu0 0
    %154 = vmatpush1.bf16.msra.mxu0 0
    %155 = vmatprep.mubr.bf16.mxu0 0
    %156 = vmatmul.mubr.bf16.gmra.mrb[0].mxu0 %v73
    %v157 = vpop.f32.mrb[0].mxu0
    %v158 = vadd.f32 %v67, %v157
    %v159 = vpop.f32.mrb[0].mxu0
    %v160 = vpop.f32.mrb[0].mxu0
    %v161 = vadd.f32 %v67, %v160
    %v162 = vpop.f32.mrb[0].mxu0
    %163 = vdwg.mxu0
    %164 = vst [vmem:[#allocation7] sm:$0xff] %v158
    %165 = vst [vmem:[#allocation7 + $0x8] sm:$0xff] %v161
    // Predicated region
    $region22: #{tpu_custom_call.1} parent=1 // pred_check
      _
    $region23: #{tpu_custom_call.1} parent=1 // pred_check_branch
      %167 = sbr.rel (0) target = $region25
    $region24: #{tpu_custom_call.1} parent=1 // pred_region
      %s169 = ssub.s32 256, 256
      %170 = vsyncadd [#allocation4], %s169
      %s171 = sshll.u32 [#allocation7], 4
      %s172 = int_to_ptr.vmem [resolvable:$true] %s171
      %177 = dma.vmem_to_hbm [thread:$0]  %s172, 256, %s3, [#allocation4], 128, 128, 8
    $region25: #{tpu_custom_call.1} parent=1 // pred_fallthru
      _
    // Predicated region
    $region26: #{tpu_custom_call.1} parent=1 // pred_check
      _
    $region27: #{tpu_custom_call.1} parent=1 // pred_check_branch
      %179 = sbr.rel (0) target = $region29
    $region28: #{tpu_custom_call.1} parent=1 // pred_region
      %180 = dma.done [#allocation4], 256
    $region29: #{tpu_custom_call.1} parent=1 // pred_fallthru
      _
    %181 = vsyncpa [#allocation3], 1
    %182 = vsyncpa [#allocation6], 1
    %183 = vsyncpa [#allocation4], 1

</llo_original>
